<compile_context>
chip_gen: v6e
topology: v6e:2x2x1
jax: 0.10.0
libtpu: 0.0.40
codegen_flags: <defaults>
</compile_context>

<pallas_src>
import functools

import jax
import jax.numpy as jnp
from jax import lax
from jax.experimental import pallas as pl
from jax.experimental.pallas import tpu as pltpu

KSIZE = 7
PAD = (KSIZE - 1) // 2  # 3


# --------------------------------------------------------------------------- #
# helpers
# --------------------------------------------------------------------------- #
def _largest_divisor_leq(n, cap):
    cap = max(1, min(n, cap))
    while n % cap:
        cap -= 1
    return cap


def _pick_channel_tile(C, cap):
    """Largest channel tile that divides C and is a multiple of 8 (or C itself)."""
    if C <= cap:
        return C
    best = 0
    for t in range(8, min(C, cap) + 1, 8):
        if C % t == 0:
            best = t
    if best:
        return best
    return 8 if C % 8 == 0 else C


@functools.lru_cache(maxsize=None)
def _roll_shift_sign():
    """+1 if pltpu.roll follows the np.roll convention (out[i] = in[i - shift]),
    -1 otherwise.  Tiny one-time probe kernel -> robust across JAX versions."""
    def _probe_kernel(x_ref, o_ref):
        o_ref[...] = pltpu.roll(x_ref[...], 1, 1)

    x = jnp.arange(128, dtype=jnp.float32).reshape(1, 128)
    y = pl.pallas_call(
        _probe_kernel, out_shape=jax.ShapeDtypeStruct((1, 128), jnp.float32))(x)
    return 1 if float(y[0, 0]) > 64.0 else -1


# --------------------------------------------------------------------------- #
# kernel
# --------------------------------------------------------------------------- #
def _spatial_attention_kernel(w_ref, x_ref, o_ref, sum_ref, max_ref, pad_ref,
                              *, C, H, W, lpad, rows_per_chunk, roll_sign):
    # w_ref   : SMEM (98,) f32                  conv weights, flat [c, ki, kj]
    # x_ref   : VMEM (TB, TC, HW)               channel-tile of the input slab
    # o_ref   : VMEM (TB, 1, HW)                attention map (lane-dense)
    # sum_ref : VMEM (TB, HW) f32               running channel sum
    # max_ref : VMEM (TB, HW) f32               running channel max
    # pad_ref : VMEM (2, TB, RTOT) f32          zero-margined avg/max maps
    k = pl.program_id(1)
    nk = pl.num_programs(1)
    TB, TC, HW = x_ref.shape
    RTOT = pad_ref.shape[-1]

    # ---- channel-tiled fused sum+max reduction into persistent VMEM scratch --
    @pl.when(k == 0)
    def _init():
        sum_ref[...] = jnp.zeros_like(sum_ref)
        max_ref[...] = jnp.full_like(max_ref, -jnp.inf)

    csub = 8 if TC % 8 == 0 else TC          # sublane-aligned sub-chunk
    nsub = TC // csub

    def _reduce_body(i, carry):
        c0 = i * csub
        if csub % 8 == 0:
            c0 = pl.multiple_of(c0, 8)
        chunk = x_ref[:, pl.ds(c0, csub), :].astype(jnp.float32)
        sum_ref[...] = sum_ref[...] + jnp.sum(chunk, axis=1)
        max_ref[...] = jnp.maximum(max_ref[...], jnp.max(chunk, axis=1))
        return carry

    lax.fori_loop(0, nsub, _reduce_body, 0)

    # ---- epilogue (last channel step): 7x7 conv (2->1, pad 3) + sigmoid ------
    @pl.when(k == nk - 1)
    def _epilogue():
        avg = sum_ref[...] * (1.0 / C)
        mx = max_ref[...]

        # Zero-margined flat maps: only halos are zeroed; the interior store is
        # dense and lane-aligned (lpad is a multiple of 128).
        pad_ref[:, :, :lpad] = jnp.zeros((2, TB, lpad), jnp.float32)
        pad_ref[:, :, lpad + HW:] = jnp.zeros((2, TB, RTOT - lpad - HW), jnp.float32)
        pad_ref[0, :, lpad:lpad + HW] = avg
        pad_ref[1, :, lpad:lpad + HW] = mx

        ch_lanes = rows_per_chunk * W            # row-aligned output chunk
        n_chunks = H // rows_per_chunk

        # Column-validity masks (kill row wrap-around of the flat shifted
        # windows), generated in-kernel -- no HBM input, no extra DMA.
        col = lax.broadcasted_iota(jnp.int32, (1, ch_lanes), 1) % W
        masks = [jnp.where((col >= PAD - dj) & (col < W + PAD - dj), 1.0, 0.0)
                 for dj in range(KSIZE)]

        for blk in range(n_chunks):
            q0 = blk * ch_lanes
            acc = jnp.zeros((TB, ch_lanes), jnp.float32)
            for c in range(2):
                # per-dj partials: 2 VALU ops / tap, 7 base loads per channel
                u = [jnp.zeros((TB, ch_lanes), jnp.float32) for _ in range(KSIZE)]
                for di in range(KSIZE):
                    s = lpad + (di - PAD) * W + q0
                    base = pad_ref[c, :, s:s + ch_lanes]       # one dense load
                    for dj in range(KSIZE):
                        wv = w_ref[c * KSIZE * KSIZE + di * KSIZE + dj]
                        u[dj] = u[dj] + wv * base
                for dj in range(KSIZE):
                    if dj == PAD:
                        acc = acc + u[dj]                      # mask is all-ones
                    else:
                        shift = (roll_sign * (PAD - dj)) % ch_lanes
                        acc = acc + masks[dj] * pltpu.roll(u[dj], shift, 1)
            o_ref[:, 0, q0:q0 + ch_lanes] = jax.nn.sigmoid(acc).astype(o_ref.dtype)


# --------------------------------------------------------------------------- #
# wrapper
# --------------------------------------------------------------------------- #
def spatial_attention(x, w, *, tb=None, tc=None, rows_per_chunk=None):
    """x: (N, C, H, W); w: (1, 2, 7, 7) OIHW conv weight. Returns (N, 1, H, W)."""
    N, C, H, W = x.shape
    HW = H * W
    isz = jnp.dtype(x.dtype).itemsize

    margin = PAD * W + PAD
    lpad = ((margin + 127) // 128) * 128                 # 128-aligned left halo
    rtot = ((lpad + HW + margin + 127) // 128) * 128

    # ---- generation-aware VMEM budget (v5e/v6e: 128 MiB, v7x: 64 MiB) --------
    try:
        phys_vmem = int(pltpu.get_tpu_info().vmem_capacity_bytes)
    except Exception:  # pragma: no cover - conservative fallback
        phys_vmem = 64 << 20
    usable = phys_vmem * 4 // 5                          # compiler-scratch headroom

    def _fixed_bytes(tb_):
        return (2 * tb_ * HW * isz                       # double-buffered out block
                + 2 * tb_ * HW * 4                       # sum/max scratch
                + 2 * tb_ * rtot * 4)                    # padded conv scratch

    # ---- batch tile: >= 2 steps along the "parallel" axis (v7x dual TC) ------
    if tb is None:
        tb = 1 if N <= 1 else _largest_divisor_leq(N, max(1, N // 2))
        while tb > 1 and _fixed_bytes(tb) > usable // 4:
            tb = _largest_divisor_leq(N, tb - 1)
    assert N % tb == 0

    # ---- channel tile: double-buffered x block sized to ~2/3 of VMEM budget --
    if tc is None:
        x_budget = max(usable * 2 // 3, usable - _fixed_bytes(tb) - (2 << 20))
        tc_cap = max(1, x_budget // (2 * tb * HW * isz))
        tc = _pick_channel_tile(C, tc_cap)
    assert C % tc == 0

    # ---- rows per conv chunk: keep epilogue accumulators vreg-resident -------
    if rows_per_chunk is None:
        target_lanes = max(W, 4096 // tb)
        rows_per_chunk = 1
        for d in range(1, H + 1):
            if H % d == 0 and d * W <= target_lanes:
                rows_per_chunk = d
    assert H % rows_per_chunk == 0

    need = 2 * tb * tc * HW * isz + _fixed_bytes(tb) + (2 << 20)
    vmem_limit = int(max(min(max(need, 32 << 20), usable), need))

    x_flat = x.reshape(N, C, HW)                         # lane-dense last dim
    w_flat = w.reshape(-1).astype(jnp.float32)           # (98,)

    kernel = functools.partial(
        _spatial_attention_kernel, C=C, H=H, W=W, lpad=lpad,
        rows_per_chunk=rows_per_chunk, roll_sign=_roll_shift_sign())

    out = pl.pallas_call(
        kernel,
        out_shape=jax.ShapeDtypeStruct((N, 1, HW), x.dtype),
        grid_spec=pltpu.PrefetchScalarGridSpec(
            num_scalar_prefetch=0,
            grid=(N // tb, C // tc),                     # (parallel, arbitrary)
            in_specs=[
                pl.BlockSpec(memory_space=pltpu.MemorySpace.SMEM),   # weights
                pl.BlockSpec((tb, tc, HW), lambda n, k: (n, k, 0)),  # x tile
            ],
            out_specs=pl.BlockSpec((tb, 1, HW), lambda n, k: (n, 0, 0)),
            scratch_shapes=[
                pltpu.VMEM((tb, HW), jnp.float32),       # running channel sum
                pltpu.VMEM((tb, HW), jnp.float32),       # running channel max
                pltpu.VMEM((2, tb, rtot), jnp.float32),  # zero-margined maps
            ],
        ),
        compiler_params=pltpu.CompilerParams(
            dimension_semantics=("parallel", "arbitrary"),
            vmem_limit_bytes=vmem_limit,
        ),
    )(w_flat, x_flat)

    return out.reshape(N, 1, H, W)


# --------------------------------------------------------------------------- #
# pure-JAX reference (matches torch semantics)
# --------------------------------------------------------------------------- #
def spatial_attention_ref(x, w):
    avg_out = jnp.mean(x, axis=1, keepdims=True)
    max_out = jnp.max(x, axis=1, keepdims=True)
    z = jnp.concatenate([avg_out, max_out], axis=1)      # (N, 2, H, W)
    y = lax.conv_general_dilated(
        z.astype(jnp.float32), w.astype(jnp.float32),
        window_strides=(1, 1), padding=((PAD, PAD), (PAD, PAD)),
        dimension_numbers=("NCHW", "OIHW", "NCHW"))
    return jax.nn.sigmoid(y).astype(x.dtype)


if __name__ == "__main__":
    key = jax.random.PRNGKey(0)
    kx, kw, kx2 = jax.random.split(key, 3)

    N, C, H, W = 2, 4, 16, 16
    x = jax.random.normal(kx, (N, C, H, W), dtype=jnp.float32)

    # Deterministic conv weight init (PyTorch default kaiming-uniform bound).
    bound = 1.0 / float((2 * KSIZE * KSIZE) ** 0.5)
    w = jax.random.uniform(kw, (1, 2, KSIZE, KSIZE),
                           minval=-bound, maxval=bound, dtype=jnp.float32)

    out = jax.block_until_ready(spatial_attention(x, w))
    ref = spatial_attention_ref(x, w)
    assert out.shape == (N, 1, H, W), out.shape
    assert jnp.allclose(out, ref, atol=1e-4, rtol=1e-4), (
        float(jnp.max(jnp.abs(out - ref))))

    # Exercise the channel-tiled accumulation (2 channel steps), the multi-batch
    # "parallel" axis and the multi-chunk conv epilogue paths.
    x2 = jax.random.normal(kx2, (4, 16, 16, 16), dtype=jnp.float32)
    out2 = jax.block_until_ready(
        spatial_attention(x2, w, tb=2, tc=8, rows_per_chunk=8))
    ref2 = spatial_attention_ref(x2, w)
    assert jnp.allclose(out2, ref2, atol=1e-4, rtol=1e-4), (
        float(jnp.max(jnp.abs(out2 - ref2))))

    print("KERNEL_OK")
</pallas_src>

<mosaic_0001>
module attributes {stable_mosaic.version = 11 : i64} {
  func.func @_probe_kernel(%arg0: memref<1x128xf32, #tpu.memory_space<vmem>>, %arg1: memref<1x128xf32, #tpu.memory_space<vmem>>) attributes {dimension_semantics = [], scalar_prefetch = 0 : i64, scratch_operands = 0 : i64, tpu.core_type = #tpu.core_type<tc>} {
    %c0 = arith.constant 0 : index
    %c0_0 = arith.constant 0 : index
    %0 = vector.load %arg0[%c0, %c0_0] : memref<1x128xf32, #tpu.memory_space<vmem>>, vector<1x128xf32>
    %c1_i32 = arith.constant 1 : i32
    %1 = tpu.dynamic_rotate %0 by %c1_i32 dim 1 : vector<1x128xf32>, i32 -> vector<1x128xf32>
    %c0_1 = arith.constant 0 : index
    %c0_2 = arith.constant 0 : index
    %2 = vector.load %arg1[%c0_1, %c0_2] : memref<1x128xf32, #tpu.memory_space<vmem>>, vector<1x128xf32>
    tpu.vector_store %arg1[%c0_1, %c0_2], %1 {strides = array<i32>} : memref<1x128xf32, #tpu.memory_space<vmem>>, vector<1x128xf32>,
    return
  }
}

</mosaic_0001>

<llo_original>
// kernel: tpu_custom_call.1
$region0: #{tpu_custom_call.1}
  #allocation0 [shape = 'u32[]', space=smem, size = 0x4, offset = 0x4, fixed_abs, tag = 'smem constant byte address 0x4 - core index']
  #allocation1 [shape = 'u32[144,128]{1,0:T(1,128)}', space=vmem, size = 0x12000, scoped, tag = 'internal scratch']
  %s0 = inlined_call_operand.hbm [shape: f32[1,128], index: 0, kind: input, shape index: {}]
  %s1 = inlined_call_operand.hbm [shape: f32[1,128], index: 1, kind: output, shape index: {}]
  %s2 = sld [smem:[#allocation0]]
  $region18: #{tpu_custom_call.1} parent=0
    _
  %s4 = ssub.s32 1, %s2
  %s5 = scalar_select 0, %s4, %s2
  $region1: #{tpu_custom_call.1} parent=0
    #allocation2 [shape = 'u8[512]{0}', space=vmem, size = 0x400, scoped, tag = 'input window, operand 0, single buffered']
    #allocation3 [shape = 's32[1]{0}', space=sflag, size = 0x4, scoped, tag = 'scoped memory for tpu_custom_call.1']
    #allocation4 [shape = 's32[1]{0}', space=sflag, size = 0x4, scoped, tag = 'scoped memory for tpu_custom_call.1']
    #allocation5 [shape = 'u8[512]{0}', space=vmem, size = 0x400, scoped, tag = 'output window, operand 0, single buffered']
    %6 = vsyncpa [#allocation3], 0
    %7 = vsyncpa [#allocation4], 0
    // Predicated region
    $region2: #{tpu_custom_call.1} parent=1 // pred_check
      _
    $region3: #{tpu_custom_call.1} parent=1 // pred_check_branch
      %9 = sbr.rel (0) target = $region5
    $region4: #{tpu_custom_call.1} parent=1 // pred_region
      %s11 = ssub.s32 16, 16
      %12 = vsyncadd [#allocation3], %s11
      %s14 = sshll.u32 [#allocation2], 4
      %s15 = int_to_ptr.vmem [resolvable:$true] %s14
      %17 = dma.hbm_to_vmem [thread:$0]  %s0, 16, %s15, [#allocation3]
    $region5: #{tpu_custom_call.1} parent=1 // pred_fallthru
      _
    // Predicated region
    $region6: #{tpu_custom_call.1} parent=1 // pred_check
      _
    $region7: #{tpu_custom_call.1} parent=1 // pred_check_branch
      %19 = sbr.rel (0) target = $region9
    $region8: #{tpu_custom_call.1} parent=1 // pred_region
      %20 = dma.done [#allocation3], 16
    $region9: #{tpu_custom_call.1} parent=1 // pred_fallthru
      _
    %v21 = vld [vmem:[#allocation2] sm:$0x1]
    %22 = vrot.lane.b32.xlu0 %v21, 1
    %v23 = vpop.permute.xlu0 %22
    %24 = vst [vmem:[#allocation5] sm:$0x1] %v23
    // Predicated region
    $region10: #{tpu_custom_call.1} parent=1 // pred_check
      _
    $region11: #{tpu_custom_call.1} parent=1 // pred_check_branch
      %26 = sbr.rel (0) target = $region13
    $region12: #{tpu_custom_call.1} parent=1 // pred_region
      %s28 = ssub.s32 16, 16
      %29 = vsyncadd [#allocation4], %s28
      %s31 = sshll.u32 [#allocation5], 4
      %s32 = int_to_ptr.vmem [resolvable:$true] %s31
      %34 = dma.vmem_to_hbm [thread:$0]  %s32, 16, %s1, [#allocation4]
    $region13: #{tpu_custom_call.1} parent=1 // pred_fallthru
      _
    // Predicated region
    $region14: #{tpu_custom_call.1} parent=1 // pred_check
      _
    $region15: #{tpu_custom_call.1} parent=1 // pred_check_branch
      %36 = sbr.rel (0) target = $region17
    $region16: #{tpu_custom_call.1} parent=1 // pred_region
      %37 = dma.done [#allocation4], 16
    $region17: #{tpu_custom_call.1} parent=1 // pred_fallthru
      _
    %38 = vsyncpa [#allocation3], 1
    %39 = vsyncpa [#allocation4], 1

</llo_original>
